<compile_context>
chip_gen: v7x
topology: tpu7x:2x2x1
jax: 0.10.0
libtpu: 0.0.40
codegen_flags: <defaults>
</compile_context>

<pallas_src>
import functools

import jax
import jax.numpy as jnp
from jax.experimental import pallas as pl
from jax.experimental.pallas import tpu as pltpu

_NEG = -1.0e30  # masked lanes: never win the max, exp underflows to exactly 0 in f32


def _round_up(x, m):
    return ((x + m - 1) // m) * m


def _pick_tn(n, block_rows):
    """Row tile: multiple of 8 (<=64) or of 64 (>64); shrinks for small N so the
    'parallel' row axis still has enough blocks for both v7x TensorCores."""
    cap = _round_up(max(1, -(-n // 8)), 8)            # ~ceil(n/8) rows/block -> ~8 blocks
    tn = max(8, min(_round_up(block_rows, 8), cap))
    if tn > 64:
        tn = _round_up(tn, 64)                        # keep the 64-row sub-block exact
    return tn


def _pick_tc(c, tn, itemsize, max_block_bytes, max_lanes=8192):
    """Class tile: always a multiple of 128 (ceil-tiling + in-kernel tail mask),
    capped by the per-tile byte budget and by a lane cap bounding the statically
    unrolled chunk loop (code size)."""
    c_pad = _round_up(c, 128)
    budget = max(128, (max_block_bytes // (tn * itemsize)) // 128 * 128)
    return int(min(c_pad, budget, max_lanes))


def _vmem_limit_bytes():
    """Generation-aware VMEM limit: ~70% of per-core capacity, never above 64 MiB
    (v7x has only 64 MiB per TensorCore; v5e/v6e have 128 MiB)."""
    try:
        cap = int(pltpu.get_tpu_info().vmem_capacity_bytes)
    except Exception:
        cap = 64 * 1024 * 1024                        # assume the smallest generation
    return int(min(64 * 1024 * 1024, int(cap * 0.7)))


def _lse_xsum_kernel(x_ref, lse_ref, xsum_ref, m_acc, l_acc, s_acc,
                     *, num_classes, tc, nk, sub):
    """Streams one (tn, tc) logits tile; keeps per-lane (tn,128) online-softmax stats
    (max m, exp-sum l, plain sum s) across the class-tile axis; emits per-token
    lse and sum(logits) on the last class tile."""
    k = pl.program_id(1)
    tn = m_acc.shape[0]
    n_sub = tn // sub
    rem = num_classes - (nk - 1) * tc                 # valid columns of the last class tile

    @pl.when(k == 0)
    def _init():
        m_acc[...] = jnp.full((tn, 128), _NEG, jnp.float32)
        l_acc[...] = jnp.zeros((tn, 128), jnp.float32)
        s_acc[...] = jnp.zeros((tn, 128), jnp.float32)

    def accumulate(ncols):
        # ncols: Python int (<= tc) = number of real classes in this tile.
        nchunks = -(-ncols // 128)
        tail = ncols - (nchunks - 1) * 128            # valid lanes in the last chunk
        nfull = nchunks if tail == 128 else nchunks - 1
        for r in range(n_sub):                        # 64-row sub-blocks keep carries in vregs
            rows = slice(r * sub, (r + 1) * sub)
            m_prev = m_acc[rows, :]

            # pass 1: per-lane max of this tile (native dtype for the full chunks)
            cmax = None
            for j in range(nfull):
                cj = x_ref[rows, j * 128:(j + 1) * 128]
                cmax = cj if cmax is None else jnp.maximum(cmax, cj)
            m_new = m_prev if cmax is None else jnp.maximum(m_prev, cmax.astype(jnp.float32))
            if tail < 128:                            # tail chunk: mask padded lanes
                lane = jax.lax.broadcasted_iota(jnp.int32, (sub, 128), 1)
                tmask = lane < tail
                ct = x_ref[rows, nfull * 128:(nfull + 1) * 128].astype(jnp.float32)
                ct_m = jnp.where(tmask, ct, _NEG)
                m_new = jnp.maximum(m_new, ct_m)

            # pass 2: exp-sum and plain sum against the settled per-lane max
            p = jnp.zeros((sub, 128), jnp.float32)
            s = jnp.zeros((sub, 128), jnp.float32)
            for j in range(nfull):
                cj = x_ref[rows, j * 128:(j + 1) * 128].astype(jnp.float32)
                p = p + jnp.exp(cj - m_new)
                s = s + cj
            if tail < 128:
                p = p + jnp.exp(ct_m - m_new)         # masked lanes: exp(-1e30 - m) == 0
                s = s + jnp.where(tmask, ct, 0.0)

            alpha = jnp.exp(m_prev - m_new)
            l_acc[rows, :] = alpha * l_acc[rows, :] + p
            s_acc[rows, :] = s_acc[rows, :] + s
            m_acc[rows, :] = m_new

    if nk == 1:
        accumulate(rem)
    elif rem == tc:
        accumulate(tc)
    else:
        @pl.when(k < nk - 1)
        def _full_tiles():
            accumulate(tc)

        @pl.when(k == nk - 1)
        def _tail_tile():
            accumulate(rem)

    @pl.when(k == nk - 1)
    def _finalize():
        m = m_acc[...]
        row_max = jnp.max(m, axis=-1, keepdims=True)              # single XLU pass per stat
        row_l = jnp.sum(l_acc[...] * jnp.exp(m - row_max), axis=-1, keepdims=True)
        lse_ref[...] = row_max + jnp.log(row_l)
        xsum_ref[...] = jnp.sum(s_acc[...], axis=-1, keepdims=True)


def label_smoothing_cross_entropy_sequence(out, tgt, *, epsilon_ls=0.1, ignore_index=0,
                                           block_rows=256, max_block_bytes=None):
    """out: (B, S, C) logits (any float dtype); tgt: (B, S) int targets -> scalar loss."""
    b, s, c = out.shape
    n = b * s
    x = out.reshape(n, c)                              # stream HBM->VMEM in native dtype
    t = tgt.reshape(n).astype(jnp.int32)

    vmem_limit = _vmem_limit_bytes()
    if max_block_bytes is None:
        max_block_bytes = min(8 * 1024 * 1024, vmem_limit // 4)   # 2x double-buffered << limit

    tn = _pick_tn(n, block_rows)
    sub = 64 if tn % 64 == 0 else tn
    tc = _pick_tc(c, tn, x.dtype.itemsize, max_block_bytes)
    nk = -(-c // tc)
    grid = (-(-n // tn), nk)

    kernel = functools.partial(_lse_xsum_kernel, num_classes=c, tc=tc, nk=nk, sub=sub)

    # TODO(synk): per-token stats are written as lane-width-1 (N,1) blocks; a lane-dense
    # (num_row_blocks, TN) layout would avoid masked stores but the writeback is ~1/(2C)
    # of the input traffic, so it is left simple.
    lse, xsum = pl.pallas_call(
        kernel,
        out_shape=(jax.ShapeDtypeStruct((n, 1), jnp.float32),
                   jax.ShapeDtypeStruct((n, 1), jnp.float32)),
        grid_spec=pltpu.PrefetchScalarGridSpec(
            num_scalar_prefetch=0,
            grid=grid,
            in_specs=[pl.BlockSpec((tn, tc), lambda i, k: (i, k))],
            out_specs=(pl.BlockSpec((tn, 1), lambda i, k: (i, 0)),
                       pl.BlockSpec((tn, 1), lambda i, k: (i, 0))),
            scratch_shapes=[pltpu.VMEM((tn, 128), jnp.float32)] * 3,   # m, l, sum(x)
        ),
        compiler_params=pltpu.CompilerParams(
            dimension_semantics=("parallel", "arbitrary"),
            vmem_limit_bytes=vmem_limit,
        ),
        cost_estimate=pl.CostEstimate(
            flops=5 * n * c,
            transcendentals=n * c,
            bytes_accessed=int(n * c * x.dtype.itemsize) + 12 * n,
        ),
    )(x)

    lse = lse[:, 0]
    xsum = xsum[:, 0]
    # Target logit: ~N-element gather done in the wrapper (keeps the kernel HBM-bound).
    x_tgt = jnp.take_along_axis(x, t[:, None], axis=-1)[:, 0].astype(jnp.float32)

    fill = float(epsilon_ls) / (c - 1)
    logp_tgt = x_tgt - lse
    sum_logp = xsum - c * lse
    per_tok = -((1.0 - float(epsilon_ls) - fill) * logp_tgt + fill * sum_logp)

    valid = t != jnp.int32(ignore_index)
    per_tok = jnp.where(valid, per_tok, 0.0)
    count = jnp.sum(valid.astype(jnp.float32))
    # Guard count==0 (the PyTorch module would NaN on an empty masked_select).
    return jnp.sum(per_tok) / jnp.maximum(count, 1.0)


def _reference(out, tgt, *, epsilon_ls=0.1, ignore_index=0):
    """Pure-JAX reference mirroring the PyTorch forward semantics."""
    c = out.shape[-1]
    fill = epsilon_ls / (c - 1)
    logp = jax.nn.log_softmax(out.astype(jnp.float32), axis=-1)
    onehot = jax.nn.one_hot(tgt, c, dtype=jnp.float32)
    smooth = onehot * (1.0 - epsilon_ls) + (1.0 - onehot) * fill
    ignore = (tgt == ignore_index)[..., None]
    smooth = jnp.where(ignore, 0.0, smooth)
    loss = jnp.sum(-smooth * logp, axis=-1)
    loss = jnp.where(ignore[..., 0], 0.0, loss)
    return jnp.sum(loss) / jnp.sum((~ignore[..., 0]).astype(jnp.float32))


if __name__ == "__main__":
    EPS, IGNORE = 0.1, 0
    key = jax.random.PRNGKey(0)
    k1, k2, k3, k4, k5, k6 = jax.random.split(key, 6)

    # Test 1: f32 logits, C < 128 -> single class tile with a lane-masked tail chunk.
    B, S, C = 2, 8, 32
    out1 = jax.random.normal(k1, (B, S, C), dtype=jnp.float32)
    tgt1 = jax.random.randint(k2, (B, S), 0, C, dtype=jnp.int32).at[0, 0].set(IGNORE)
    got1 = jax.block_until_ready(
        label_smoothing_cross_entropy_sequence(out1, tgt1, epsilon_ls=EPS, ignore_index=IGNORE))
    ref1 = jax.block_until_ready(_reference(out1, tgt1, epsilon_ls=EPS, ignore_index=IGNORE))
    assert jnp.allclose(got1, ref1, rtol=1e-5, atol=1e-5), (got1, ref1)

    # Test 2: bf16 logits, partial row blocks + 2 evenly divided class tiles (online LSE).
    B2, S2, C2 = 3, 7, 256
    out2 = jax.random.normal(k3, (B2, S2, C2), dtype=jnp.bfloat16)
    tgt2 = jax.random.randint(k4, (B2, S2), 0, C2, dtype=jnp.int32).at[0, 0].set(IGNORE)
    got2 = jax.block_until_ready(
        label_smoothing_cross_entropy_sequence(out2, tgt2, epsilon_ls=EPS, ignore_index=IGNORE,
                                               block_rows=8, max_block_bytes=8 * 128 * 2))
    ref2 = jax.block_until_ready(_reference(out2, tgt2, epsilon_ls=EPS, ignore_index=IGNORE))
    assert jnp.allclose(got2, ref2, rtol=1e-4, atol=1e-4), (got2, ref2)

    # Test 3: bf16 logits, C not a multiple of the class tile -> pl.when tail-tile branch.
    B3, S3, C3 = 2, 5, 200
    out3 = jax.random.normal(k5, (B3, S3, C3), dtype=jnp.bfloat16)
    tgt3 = jax.random.randint(k6, (B3, S3), 0, C3, dtype=jnp.int32).at[0, 0].set(IGNORE)
    got3 = jax.block_until_ready(
        label_smoothing_cross_entropy_sequence(out3, tgt3, epsilon_ls=EPS, ignore_index=IGNORE,
                                               block_rows=16, max_block_bytes=8 * 128 * 2))
    ref3 = jax.block_until_ready(_reference(out3, tgt3, epsilon_ls=EPS, ignore_index=IGNORE))
    assert jnp.allclose(got3, ref3, rtol=1e-4, atol=1e-4), (got3, ref3)

    print("KERNEL_OK")
</pallas_src>

<mosaic_0001>
module attributes {stable_mosaic.version = 11 : i64} {
  func.func @_lse_xsum_kernel(%arg0: i32, %arg1: i32, %arg2: memref<8x128xf32, #tpu.memory_space<vmem>>, %arg3: memref<8x1xf32, #tpu.memory_space<vmem>>, %arg4: memref<8x1xf32, #tpu.memory_space<vmem>>, %arg5: memref<8x128xf32, #tpu.memory_space<vmem>>, %arg6: memref<8x128xf32, #tpu.memory_space<vmem>>, %arg7: memref<8x128xf32, #tpu.memory_space<vmem>>) attributes {dimension_semantics = [#tpu.dimension_semantics<parallel>, #tpu.dimension_semantics<arbitrary>], iteration_bounds = array<i64: 2, 1>, scalar_prefetch = 0 : i64, scratch_operands = 3 : i64, tpu.core_type = #tpu.core_type<tc>, window_params = [{transform_indices = @transform_0, window_bounds = array<i64: 8, 128>}, {transform_indices = @transform_1, window_bounds = array<i64: 8, 1>}, {transform_indices = @transform_2, window_bounds = array<i64: 8, 1>}]} {
    %c0_i32 = arith.constant 0 : i32
    %0 = arith.cmpi eq, %arg1, %c0_i32 : i32
    %1 = arith.extui %0 : i1 to i32
    %c0_i32_0 = arith.constant 0 : i32
    %2 = arith.cmpi ne, %1, %c0_i32_0 : i32
    scf.if %2 {
      %cst_19 = arith.constant -1.000000e+30 : f32
      %32 = vector.broadcast %cst_19 : f32 to vector<8x128xf32>
      %c0_20 = arith.constant 0 : index
      %c0_21 = arith.constant 0 : index
      %33 = vector.load %arg5[%c0_20, %c0_21] : memref<8x128xf32, #tpu.memory_space<vmem>>, vector<8x128xf32>
      tpu.vector_store %arg5[%c0_20, %c0_21], %32 {strides = array<i32>} : memref<8x128xf32, #tpu.memory_space<vmem>>, vector<8x128xf32>,
      %cst_22 = arith.constant 0.000000e+00 : f32
      %34 = vector.broadcast %cst_22 : f32 to vector<8x128xf32>
      %c0_23 = arith.constant 0 : index
      %c0_24 = arith.constant 0 : index
      %35 = vector.load %arg6[%c0_23, %c0_24] : memref<8x128xf32, #tpu.memory_space<vmem>>, vector<8x128xf32>
      tpu.vector_store %arg6[%c0_23, %c0_24], %34 {strides = array<i32>} : memref<8x128xf32, #tpu.memory_space<vmem>>, vector<8x128xf32>,
      %cst_25 = arith.constant 0.000000e+00 : f32
      %36 = vector.broadcast %cst_25 : f32 to vector<8x128xf32>
      %c0_26 = arith.constant 0 : index
      %c0_27 = arith.constant 0 : index
      %37 = vector.load %arg7[%c0_26, %c0_27] : memref<8x128xf32, #tpu.memory_space<vmem>>, vector<8x128xf32>
      tpu.vector_store %arg7[%c0_26, %c0_27], %36 {strides = array<i32>} : memref<8x128xf32, #tpu.memory_space<vmem>>, vector<8x128xf32>,
    } else {
    }
    %c0 = arith.constant 0 : index
    %c0_1 = arith.constant 0 : index
    %3 = vector.load %arg5[%c0, %c0_1] : memref<8x128xf32, #tpu.memory_space<vmem>>, vector<8x128xf32>
    %4 = tpu.iota {dimensions = array<i32: 1>} : vector<8x128xi32>
    %c32_i32 = arith.constant 32 : i32
    %5 = vector.broadcast %c32_i32 : i32 to vector<8x128xi32>
    %6 = arith.cmpi slt, %4, %5 : vector<8x128xi32>
    %c0_2 = arith.constant 0 : index
    %c0_3 = arith.constant 0 : index
    %7 = vector.load %arg2[%c0_2, %c0_3] : memref<8x128xf32, #tpu.memory_space<vmem>>, vector<8x128xf32>
    %cst = arith.constant -1.000000e+30 : f32
    %8 = vector.broadcast %cst : f32 to vector<8x128xf32>
    %9 = arith.select %6, %7, %8 : vector<8x128xi1>, vector<8x128xf32>
    %10 = arith.maximumf %3, %9 : vector<8x128xf32>
    %cst_4 = arith.constant 0.000000e+00 : f32
    %11 = vector.broadcast %cst_4 : f32 to vector<8x128xf32>
    %cst_5 = arith.constant 0.000000e+00 : f32
    %12 = vector.broadcast %cst_5 : f32 to vector<8x128xf32>
    %13 = arith.subf %9, %10 : vector<8x128xf32>
    %14 = math.exp %13 : vector<8x128xf32>
    %15 = arith.addf %11, %14 : vector<8x128xf32>
    %cst_6 = arith.constant 0.000000e+00 : f32
    %16 = vector.broadcast %cst_6 : f32 to vector<8x128xf32>
    %17 = arith.select %6, %7, %16 : vector<8x128xi1>, vector<8x128xf32>
    %18 = arith.addf %12, %17 : vector<8x128xf32>
    %19 = arith.subf %3, %10 : vector<8x128xf32>
    %20 = math.exp %19 : vector<8x128xf32>
    %c0_7 = arith.constant 0 : index
    %c0_8 = arith.constant 0 : index
    %21 = vector.load %arg6[%c0_7, %c0_8] : memref<8x128xf32, #tpu.memory_space<vmem>>, vector<8x128xf32>
    %22 = arith.mulf %20, %21 : vector<8x128xf32>
    %23 = arith.addf %22, %15 : vector<8x128xf32>
    %c0_9 = arith.constant 0 : index
    %c0_10 = arith.constant 0 : index
    %24 = vector.load %arg6[%c0_9, %c0_10] : memref<8x128xf32, #tpu.memory_space<vmem>>, vector<8x128xf32>
    tpu.vector_store %arg6[%c0_9, %c0_10], %23 {strides = array<i32>} : memref<8x128xf32, #tpu.memory_space<vmem>>, vector<8x128xf32>,
    %c0_11 = arith.constant 0 : index
    %c0_12 = arith.constant 0 : index
    %25 = vector.load %arg7[%c0_11, %c0_12] : memref<8x128xf32, #tpu.memory_space<vmem>>, vector<8x128xf32>
    %26 = arith.addf %25, %18 : vector<8x128xf32>
    %c0_13 = arith.constant 0 : index
    %c0_14 = arith.constant 0 : index
    %27 = vector.load %arg7[%c0_13, %c0_14] : memref<8x128xf32, #tpu.memory_space<vmem>>, vector<8x128xf32>
    tpu.vector_store %arg7[%c0_13, %c0_14], %26 {strides = array<i32>} : memref<8x128xf32, #tpu.memory_space<vmem>>, vector<8x128xf32>,
    %c0_15 = arith.constant 0 : index
    %c0_16 = arith.constant 0 : index
    %28 = vector.load %arg5[%c0_15, %c0_16] : memref<8x128xf32, #tpu.memory_space<vmem>>, vector<8x128xf32>
    tpu.vector_store %arg5[%c0_15, %c0_16], %10 {strides = array<i32>} : memref<8x128xf32, #tpu.memory_space<vmem>>, vector<8x128xf32>,
    %c0_i32_17 = arith.constant 0 : i32
    %29 = arith.cmpi eq, %arg1, %c0_i32_17 : i32
    %30 = arith.extui %29 : i1 to i32
    %c0_i32_18 = arith.constant 0 : i32
    %31 = arith.cmpi ne, %30, %c0_i32_18 : i32
    scf.if %31 {
      %c0_19 = arith.constant 0 : index
      %c0_20 = arith.constant 0 : index
      %32 = vector.load %arg5[%c0_19, %c0_20] : memref<8x128xf32, #tpu.memory_space<vmem>>, vector<8x128xf32>
      %cst_21 = arith.constant dense<0xFF800000> : vector<8xf32>
      %33 = vector.multi_reduction <maximumf>, %32, %cst_21 [1] : vector<8x128xf32> to vector<8xf32>
      %34 = vector.shape_cast %33 : vector<8xf32> to vector<8x1xf32>
      %c0_22 = arith.constant 0 : index
      %c0_23 = arith.constant 0 : index
      %35 = vector.load %arg6[%c0_22, %c0_23] : memref<8x128xf32, #tpu.memory_space<vmem>>, vector<8x128xf32>
      %36 = vector.broadcast %34 : vector<8x1xf32> to vector<8x128xf32>
      %37 = arith.subf %32, %36 : vector<8x128xf32>
      %38 = math.exp %37 : vector<8x128xf32>
      %39 = arith.mulf %35, %38 : vector<8x128xf32>
      %cst_24 = arith.constant dense<0.000000e+00> : vector<8xf32>
      %40 = vector.multi_reduction <add>, %39, %cst_24 [1] : vector<8x128xf32> to vector<8xf32>
      %41 = vector.shape_cast %40 : vector<8xf32> to vector<8x1xf32>
      %42 = math.log %41 : vector<8x1xf32>
      %43 = arith.addf %34, %42 : vector<8x1xf32>
      %c0_25 = arith.constant 0 : index
      %c0_26 = arith.constant 0 : index
      %44 = vector.load %arg3[%c0_25, %c0_26] : memref<8x1xf32, #tpu.memory_space<vmem>>, vector<8x1xf32>
      tpu.vector_store %arg3[%c0_25, %c0_26], %43 {strides = array<i32>} : memref<8x1xf32, #tpu.memory_space<vmem>>, vector<8x1xf32>,
      %c0_27 = arith.constant 0 : index
      %c0_28 = arith.constant 0 : index
      %45 = vector.load %arg7[%c0_27, %c0_28] : memref<8x128xf32, #tpu.memory_space<vmem>>, vector<8x128xf32>
      %cst_29 = arith.constant dense<0.000000e+00> : vector<8xf32>
      %46 = vector.multi_reduction <add>, %45, %cst_29 [1] : vector<8x128xf32> to vector<8xf32>
      %47 = vector.shape_cast %46 : vector<8xf32> to vector<8x1xf32>
      %c0_30 = arith.constant 0 : index
      %c0_31 = arith.constant 0 : index
      %48 = vector.load %arg4[%c0_30, %c0_31] : memref<8x1xf32, #tpu.memory_space<vmem>>, vector<8x1xf32>
      tpu.vector_store %arg4[%c0_30, %c0_31], %47 {strides = array<i32>} : memref<8x1xf32, #tpu.memory_space<vmem>>, vector<8x1xf32>,
    } else {
    }
    return
  }
  func.func @transform_0(%arg0: i32, %arg1: i32) -> (i32, i32) {
    %c0_i32 = arith.constant 0 : i32
    return %arg0, %arg1 : i32, i32
  }
  func.func @transform_1(%arg0: i32, %arg1: i32) -> (i32, i32) {
    %c0_i32 = arith.constant 0 : i32
    %c0_i32_0 = arith.constant 0 : i32
    return %arg0, %c0_i32 : i32, i32
  }
  func.func @transform_2(%arg0: i32, %arg1: i32) -> (i32, i32) {
    %c0_i32 = arith.constant 0 : i32
    %c0_i32_0 = arith.constant 0 : i32
    return %arg0, %c0_i32 : i32, i32
  }
}

</mosaic_0001>

<llo_original>
// kernel: tpu_custom_call.1
$region0: #{tpu_custom_call.1}
  #allocation0 [shape = 'u32[]', space=smem, size = 0x4, offset = 0x4, fixed_abs, tag = 'smem constant byte address 0x4 - core index']
  #allocation1 [shape = 'u32[144,128]{1,0:T(1,128)}', space=vmem, size = 0x12000, scoped, tag = 'internal scratch']
  #allocation2 [shape = 'f32[8,128]{1,0:T(8,128)}', space=vmem, size = 0x1000, scoped, tag = 'scratch operand']
  #allocation3 [shape = 'f32[8,128]{1,0:T(8,128)}', space=vmem, size = 0x1000, scoped, tag = 'scratch operand']
  #allocation4 [shape = 'f32[8,128]{1,0:T(8,128)}', space=vmem, size = 0x1000, scoped, tag = 'scratch operand']
  %s0 = inlined_call_operand.hbm [shape: f32[16,32], index: 0, kind: input, shape index: {}]
  %s1 = inlined_call_operand.vmem [shape: f32[16,1], index: 1, kind: output, shape index: {0}]
  %s2 = inlined_call_operand.vmem [shape: f32[16,1], index: 2, kind: output, shape index: {1}]
  %3 = xla_tuple %s1, %s2
  %s4 = sld [smem:[#allocation0]]
  $region57: #{tpu_custom_call.1} parent=0
    _
  %s6 = ssub.s32 1, %s4
  %s7 = scalar_select 0, %s6, %s4
  $region1: #{tpu_custom_call.1} parent=0
    #allocation5 [shape = 'u8[8192]{0}', space=vmem, size = 0x2000, scoped, tag = 'input window, operand 0']
    #allocation6 [shape = 's32[2]{0}', space=sflag, size = 0x8, scoped, tag = 'scoped memory for tpu_custom_call.1']
    %8 = vsyncpa [#allocation6], 0
    %s9 = scalar_lea.sflag [#allocation6], 1
    %10 = vsyncpa %s9, 0
    loop: start=0, step=1, limit=4
    $region2: #{tpu_custom_call.1} parent=1 // loop_pre_header
      _
    $region3: #{tpu_custom_call.1} parent=1 // loop_header
      %s12 = sphi 0, %s16
      %p13 = scmp.ge.s32.totalorder %s12, 4
      %s19 = sphi 0, %s31
      %s20 = sphi 0, %s27
      %s21 = sphi 0, %s19
      %s22 = sphi 0, %s20
      %s23 = sphi 0, %s21
      %s24 = sphi 0, %s22
      %s36 = sphi 0, %s38
      %s39 = sphi 0, %s36
      %s40 = sphi 0, %s39
      %s56 = sphi 0, %s40
      %s62 = sphi 0, %s64
      %s65 = sphi 0, %s62
      %s66 = sphi 0, %s65
      %s82 = sphi 0, %s66
      %s88 = sphi 0, %s90
      %s91 = sphi 0, %s88
      %s92 = sphi 0, %s91
      %s108 = sphi 0, %s92
    $region4: #{tpu_custom_call.1} parent=1 // loop_header_branch
      %15 = sbr.rel (%p13) target = $region8
    $region5: #{tpu_custom_call.1} parent=1 // loop_body
      %s17 = ssub.s32 %s12, 1
      %s18 = ssub.s32 %s12, 2
      %s25 = sadd.s32 1, %s20
      %p26 = scmp.ge.s32.totalorder %s25, 1
      %s27 = scalar_select %p26, 0, %s25
      %s28 = sadd.s32 1, %s19
      %s29 = scalar_select %p26, %s28, %s19
      %p30 = scmp.ge.s32.totalorder %s29, 2
      %s31 = scalar_select %p30, 0, %s29
      %s32 = ssub.s32 %s19, %s31
      %s33 = ssub.s32 %s20, %s27
      %s34 = sor.u32 %s32, %s33
      %p35 = scmp.eq.s32.totalorder %s34, 0
      %s37 = sadd.s32 %s36, 1
      %s38 = scalar_select %p35, %s36, %s37
      %p41 = pneg %p35
      %p42 = scmp.eq.s32.totalorder %s12, 1
      %p43 = por %p41, %p42
      %p44 = scmp.ne.s32.totalorder %s36, %s39
      %p45 = scmp.eq.s32.totalorder %s12, 0
      %p46 = por %p44, %p45
      %p47 = scmp.ne.s32.totalorder %s36, %s39
      %p48 = scmp.eq.s32.totalorder %s17, 1
      %p49 = por %p47, %p48
      %p50 = scmp.ne.s32.totalorder %s39, %s40
      %p51 = scmp.eq.s32.totalorder %s17, 0
      %p52 = por %p50, %p51
      %p53 = scmp.ne.s32.totalorder %s39, %s40
      %p54 = scmp.eq.s32.totalorder %s18, 1
      %p55 = por %p53, %p54
      %p57 = scmp.ne.s32.totalorder %s40, %s56
      %p58 = scmp.eq.s32.totalorder %s18, 0
      %p59 = por %p57, %p58
      %s60 = ssub.s32 %s19, %s31
      %p61 = scmp.eq.s32.totalorder %s60, 0
      %s63 = sadd.s32 %s62, 1
      %s64 = scalar_select %p61, %s62, %s63
      %p67 = pneg %p61
      %p68 = scmp.eq.s32.totalorder %s12, 1
      %p69 = por %p67, %p68
      %p70 = scmp.ne.s32.totalorder %s62, %s65
      %p71 = scmp.eq.s32.totalorder %s12, 0
      %p72 = por %p70, %p71
      %p73 = scmp.ne.s32.totalorder %s62, %s65
      %p74 = scmp.eq.s32.totalorder %s17, 1
      %p75 = por %p73, %p74
      %p76 = scmp.ne.s32.totalorder %s65, %s66
      %p77 = scmp.eq.s32.totalorder %s17, 0
      %p78 = por %p76, %p77
      %p79 = scmp.ne.s32.totalorder %s65, %s66
      %p80 = scmp.eq.s32.totalorder %s18, 1
      %p81 = por %p79, %p80
      %p83 = scmp.ne.s32.totalorder %s66, %s82
      %p84 = scmp.eq.s32.totalorder %s18, 0
      %p85 = por %p83, %p84
      %s86 = ssub.s32 %s19, %s31
      %p87 = scmp.eq.s32.totalorder %s86, 0
      %s89 = sadd.s32 %s88, 1
      %s90 = scalar_select %p87, %s88, %s89
      %p93 = pneg %p87
      %p94 = scmp.eq.s32.totalorder %s12, 1
      %p95 = por %p93, %p94
      %p96 = scmp.ne.s32.totalorder %s88, %s91
      %p97 = scmp.eq.s32.totalorder %s12, 0
      %p98 = por %p96, %p97
      %p99 = scmp.ne.s32.totalorder %s88, %s91
      %p100 = scmp.eq.s32.totalorder %s17, 1
      %p101 = por %p99, %p100
      %p102 = scmp.ne.s32.totalorder %s91, %s92
      %p103 = scmp.eq.s32.totalorder %s17, 0
      %p104 = por %p102, %p103
      %p105 = scmp.ne.s32.totalorder %s91, %s92
      %p106 = scmp.eq.s32.totalorder %s18, 1
      %p107 = por %p105, %p106
      %p109 = scmp.ne.s32.totalorder %s92, %s108
      %p110 = scmp.eq.s32.totalorder %s18, 0
      %p111 = por %p109, %p110
      %p112 = scmp.le.s32.totalorder 1, %s12
      %p113 = scmp.lt.s32.totalorder %s12, 3
      %p114 = pnand %p112, %p113
      %p115 = pneg %p114
      // Predicated region
      $region9: #{tpu_custom_call.1} parent=5 // pred_check
        _
      $region10: #{tpu_custom_call.1} parent=5 // pred_check_branch
        %117 = sbr.rel (%p114) target = $region12
      $region11: #{tpu_custom_call.1} parent=5 // pred_region
        %s118 = ssub.s32 %s12, 1
      $region12: #{tpu_custom_call.1} parent=5 // pred_fallthru
        _
      %p119 = scmp.lt.s32.totalorder %s12, 2
      // Predicated region
      $region13: #{tpu_custom_call.1} parent=5 // pred_check
        %p120 = pneg %p119
      $region14: #{tpu_custom_call.1} parent=5 // pred_check_branch
        %122 = sbr.rel (%p120) target = $region16
      $region15: #{tpu_custom_call.1} parent=5 // pred_region
        // Predicated region
        $region17: #{tpu_custom_call.1} parent=15 // pred_check
          %p123 = pneg %p46
        $region18: #{tpu_custom_call.1} parent=15 // pred_check_branch
          %125 = sbr.rel (%p123) target = $region20
        $region19: #{tpu_custom_call.1} parent=15 // pred_region
          %s126 = sand.u32 %s36, 1
          %s127 = scalar_lea.sflag [#allocation6], %s126
          %s128 = sand.u32 %s36, 1
          %s129 = smul.addr %s128, 8
          %s130 = scalar_lea.vmem [#allocation5], %s129
          %s132 = ssub.s32 128, 128
          %133 = vsyncadd %s127, %s132
          %s134 = sadd.s32 %s20, %s19
          %s135 = smul.addr %s134, 128
          %s136 = scalar_lea.hbm %s0, %s135
          %s138 = sshll.u32 %s130, 4
          %s139 = int_to_ptr.vmem [resolvable:$true] %s138
          %141 = dma.hbm_to_vmem [thread:$0]  %s136, 128, %s139, %s127
        $region20: #{tpu_custom_call.1} parent=15 // pred_fallthru
          _
      $region16: #{tpu_custom_call.1} parent=5 // pred_fallthru
        _
      %p142 = scmp.le.s32.totalorder 1, %s12
      %p143 = scmp.lt.s32.totalorder %s12, 3
      %p144 = pnand %p142, %p143
      %p145 = pneg %p144
      // Predicated region
      $region21: #{tpu_custom_call.1} parent=5 // pred_check
        _
      $region22: #{tpu_custom_call.1} parent=5 // pred_check_branch
        %147 = sbr.rel (%p144) target = $region24
      $region23: #{tpu_custom_call.1} parent=5 // pred_region
        %s148 = ssub.s32 %s12, 1
        %s149 = sand.u32 %s39, 1
        %s150 = scalar_lea.sflag [#allocation6], %s149
        %s151 = sand.u32 %s39, 1
        %s152 = smul.addr %s151, 8
        %s153 = scalar_lea.vmem [#allocation5], %s152
        // Predicated region
        $region25: #{tpu_custom_call.1} parent=23 // pred_check
          %p154 = pneg %p52
        $region26: #{tpu_custom_call.1} parent=23 // pred_check_branch
          %156 = sbr.rel (%p154) target = $region28
        $region27: #{tpu_custom_call.1} parent=23 // pred_region
          %157 = dma.done %s150, 128
        $region28: #{tpu_custom_call.1} parent=23 // pred_fallthru
          _
        %s158 = sand.u32 %s39, 1
        %s159 = scalar_lea.sflag [#allocation6], %s158
        %s160 = sand.u32 %s39, 1
        %s161 = smul.addr %s160, 8
        %s162 = scalar_lea.vmem [#allocation5], %s161
        %p163 = pneg %p52
        %p164 = pneg %p49
        %p165 = pneg %p78
        %p166 = pneg %p75
        %p167 = scmp.lt.s32.totalorder %s21, 1
        %s168 = scalar_select %p167, %s21, 1
        %s169 = smul.addr %s168, 8
        %s170 = scalar_lea.vmem %s1, %s169
        %p171 = pneg %p104
        %p172 = pneg %p101
        %p173 = scmp.lt.s32.totalorder %s21, 1
        %s174 = scalar_select %p173, %s21, 1
        %s175 = smul.addr %s174, 8
        %s176 = scalar_lea.vmem %s2, %s175
        %p177 = scmp.lt.s32.totalorder %s21, 1
        %s178 = scalar_select %p177, %s21, 1
        %s179 = smul.addr %s178, 8
        %s180 = scalar_lea.vmem %s1, %s179
        %p181 = scmp.lt.s32.totalorder %s21, 1
        %s182 = scalar_select %p181, %s21, 1
        %s183 = smul.addr %s182, 8
        %s184 = scalar_lea.vmem %s2, %s183
        %p185 = scmp.eq.s32.totalorder %s22, 0
        // Predicated region
        $region29: #{tpu_custom_call.1} parent=23 // pred_check
          %p186 = pneg %p185
        $region30: #{tpu_custom_call.1} parent=23 // pred_check_branch
          %188 = sbr.rel (%p186) target = $region32
        $region31: #{tpu_custom_call.1} parent=23 // pred_region
          %189 = vst [vmem:[#allocation2] sm:$0xff] -1e+30
          %190 = vst [vmem:[#allocation3] sm:$0xff] 0.0
          %191 = vst [vmem:[#allocation4] sm:$0xff] 0.0
        $region32: #{tpu_custom_call.1} parent=23 // pred_fallthru
          _
        %v192 = vld [vmem:[#allocation2] sm:$0xff]
        %v193 = vlaneseq
        %v194 = vand.u32 %v193, 127
        %vm195 = vcmp.lt.s32.totalorder %v194, 32
        %v196 = vld [vmem:[%s153] sm:$0xff]
        %v197 = vsel %vm195, %v196, -1e+30
        %v198 = vmax.f32 %v192, %v197
        %v199 = vsub.f32 %v197, %v198
        %v200 = vmul.f32 %v199, 1.442695
        %v201 = vpow.pop %v200
        %v202 = vadd.f32 %v201, 0.0
        %v203 = vsel %vm195, %v196, 0.0
        %v204 = vadd.f32 %v203, 0.0
        %v205 = vsub.f32 %v192, %v198
        %v206 = vmul.f32 %v205, 1.442695
        %v207 = vpow.pop %v206
        %v208 = vld [vmem:[#allocation3] sm:$0xff]
        %v209 = vmul.f32 %v207, %v208
        %v210 = vadd.f32 %v209, %v202
        %211 = vst [vmem:[#allocation3] sm:$0xff] %v210
        %v212 = vld [vmem:[#allocation4] sm:$0xff]
        %v213 = vadd.f32 %v212, %v204
        %214 = vst [vmem:[#allocation4] sm:$0xff] %v213
        %215 = vst [vmem:[#allocation2] sm:$0xff] %v198
        // Predicated region
        $region33: #{tpu_custom_call.1} parent=23 // pred_check
          %p216 = pneg %p185
        $region34: #{tpu_custom_call.1} parent=23 // pred_check_branch
          %218 = sbr.rel (%p216) target = $region36
        $region35: #{tpu_custom_call.1} parent=23 // pred_region
          %v219 = vld [vmem:[#allocation2] sm:$0xff]
          %220 = vmax.xlane.f32.xlu0 %v219
          %v221 = vpop.xlane.xlu0 %220
          %v222 = vld [vmem:[#allocation3] sm:$0xff]
          %v223 = vsub.f32 %v219, %v221
          %v224 = vmul.f32 %v223, 1.442695
          %v225 = vpow.pop %v224
          %v226 = vmul.f32 %v222, %v225
          %227 = vadd.xlane.f32.xlu0 %v226
          %v228 = vpop.xlane.xlu0 %227
          %v229 = vlog2.pop %v228
          %v230 = vmul.f32 %v229, 0.6931472
          %v231 = vadd.f32 %v221, %v230
          %vm232 = vcmask 7168
          %233 = vst.msk [vmem:[%s180] sm:$0xff] %vm232, %v231
          %v234 = vld [vmem:[#allocation4] sm:$0xff]
          %235 = vadd.xlane.f32.xlu0 %v234
          %v236 = vpop.xlane.xlu0 %235
          %237 = vst.msk [vmem:[%s184] sm:$0xff] %vm232, %v236
        $region36: #{tpu_custom_call.1} parent=23 // pred_fallthru
          _
        %p238 = scmp.lt.s32.totalorder %s21, 1
        %s239 = scalar_select %p238, %s21, 1
        %s240 = smul.addr %s239, 8
        %s241 = scalar_lea.vmem %s1, %s240
        %p242 = scmp.lt.s32.totalorder %s21, 1
        %s243 = scalar_select %p242, %s21, 1
        %s244 = smul.addr %s243, 8
        %s245 = scalar_lea.vmem %s2, %s244
        // Predicated region
        $region37: #{tpu_custom_call.1} parent=23 // pred_check
          %p246 = pneg %p75
        $region38: #{tpu_custom_call.1} parent=23 // pred_check_branch
          %248 = sbr.rel (%p246) target = $region40
        $region39: #{tpu_custom_call.1} parent=23 // pred_region
          _
        $region40: #{tpu_custom_call.1} parent=23 // pred_fallthru
          _
        // Predicated region
        $region41: #{tpu_custom_call.1} parent=23 // pred_check
          %p249 = pneg %p101
        $region42: #{tpu_custom_call.1} parent=23 // pred_check_branch
          %251 = sbr.rel (%p249) target = $region44
        $region43: #{tpu_custom_call.1} parent=23 // pred_region
          _
        $region44: #{tpu_custom_call.1} parent=23 // pred_fallthru
          _
      $region24: #{tpu_custom_call.1} parent=5 // pred_fallthru
        _
      %p252 = scmp.le.s32.totalorder 2, %s12
      // Predicated region
      $region45: #{tpu_custom_call.1} parent=5 // pred_check
        %p253 = pneg %p252
      $region46: #{tpu_custom_call.1} parent=5 // pred_check_branch
        %255 = sbr.rel (%p253) target = $region48
      $region47: #{tpu_custom_call.1} parent=5 // pred_region
        %s256 = ssub.s32 %s12, 2
        // Predicated region
        $region49: #{tpu_custom_call.1} parent=47 // pred_check
          %p257 = pneg %p81
        $region50: #{tpu_custom_call.1} parent=47 // pred_check_branch
          %259 = sbr.rel (%p257) target = $region52
        $region51: #{tpu_custom_call.1} parent=47 // pred_region
          %p260 = scmp.lt.s32.totalorder %s23, 1
          %s261 = scalar_select %p260, %s23, 1
          %s262 = smul.addr %s261, 8
          %s263 = scalar_lea.vmem %s1, %s262
        $region52: #{tpu_custom_call.1} parent=47 // pred_fallthru
          _
        // Predicated region
        $region53: #{tpu_custom_call.1} parent=47 // pred_check
          %p264 = pneg %p107
        $region54: #{tpu_custom_call.1} parent=47 // pred_check_branch
          %266 = sbr.rel (%p264) target = $region56
        $region55: #{tpu_custom_call.1} parent=47 // pred_region
          %p267 = scmp.lt.s32.totalorder %s23, 1
          %s268 = scalar_select %p267, %s23, 1
          %s269 = smul.addr %s268, 8
          %s270 = scalar_lea.vmem %s2, %s269
        $region56: #{tpu_custom_call.1} parent=47 // pred_fallthru
          _
      $region48: #{tpu_custom_call.1} parent=5 // pred_fallthru
        _
    $region6: #{tpu_custom_call.1} parent=1 // loop_footer
      %s16 = sadd.s32 1, %s12
    $region7: #{tpu_custom_call.1} parent=1 // loop_footer_branch
      %11 = sbr.rel target = $region3
    $region8: #{tpu_custom_call.1} parent=1 // loop_exit
      _
    %271 = vsyncpa [#allocation6], 1
    %s272 = scalar_lea.sflag [#allocation6], 1
    %273 = vsyncpa %s272, 1

</llo_original>
